<compile_context>
chip_gen: v6e
topology: v6e:2x2x1
jax: 0.10.0
libtpu: 0.0.40
codegen_flags: <defaults>
</compile_context>

<pallas_src>
import functools

import jax
import jax.numpy as jnp
from jax.experimental import pallas as pl
from jax.experimental.pallas import tpu as pltpu

_LANES = 128
# (2048, 128) f32 = 1 MiB/block; 2 inputs x 2 pipeline buffers = 4 MiB VMEM.
_MAX_TILE_ROWS = 2048


def _round_up(x, m):
    return ((x + m - 1) // m) * m


def _pose_loss_kernel(pred_ref, true_ref, out_ref, acc_ref, *, inv_b):
    pid = pl.program_id(0)

    @pl.when(pid == 0)
    def _():
        acc_ref[...] = jnp.zeros_like(acc_ref)

    diff = pred_ref[...].astype(jnp.float32) - true_ref[...].astype(jnp.float32)
    # Per-lane partial sums (sublane reduction only).  The 100/1 weighting is
    # deferred to the final step so it touches 128 values once instead of
    # tile_rows * 128 values every step.
    acc_ref[...] += jnp.sum(diff * diff, axis=0, keepdims=True)

    @pl.when(pid == pl.num_programs(0) - 1)
    def _():
        # Flattened row-major: column index = lane % 4.  Columns {0, 2}
        # (even lanes) get weight 100, columns {1, 3} (odd lanes) get 1.
        lane = jax.lax.broadcasted_iota(jnp.int32, acc_ref.shape, 1)
        w = jnp.where((lane & 1) == 0, jnp.float32(100.0), jnp.float32(1.0))
        out_ref[...] = (jnp.sum(acc_ref[...] * w, keepdims=True)
                        * jnp.float32(inv_b))


def pose_loss(predicted_state, true_state):
    """predicted_state, true_state: (B, 4) float arrays. Returns scalar f32."""
    assert predicted_state.shape == true_state.shape
    assert predicted_state.ndim == 2 and predicted_state.shape[1] == 4
    # TODO(synk): for tiny B (a handful of vregs) a fused plain-jnp expression
    # is cheaper than any standalone kernel dispatch.

    b = predicted_state.shape[0]
    total = b * 4

    # Lane-dense tiling: view the flat data as (rows, 128).  If total isn't a
    # multiple of tile_rows * 128 we zero-pad once (padding is inert).
    rows_raw = -(-total // _LANES)
    if rows_raw <= _MAX_TILE_ROWS:
        tile_rows = _round_up(max(rows_raw, 1), 8)
        rows = tile_rows                      # single block
    else:
        tile_rows = _MAX_TILE_ROWS
        rows = _round_up(rows_raw, tile_rows)
    padded_total = rows * _LANES

    pred_flat = predicted_state.reshape(-1)
    true_flat = true_state.reshape(-1)
    if padded_total != total:
        pad = padded_total - total
        pred_flat = jnp.pad(pred_flat, (0, pad))
        true_flat = jnp.pad(true_flat, (0, pad))
    pred2d = pred_flat.reshape(rows, _LANES)
    true2d = true_flat.reshape(rows, _LANES)

    grid = (rows // tile_rows,)
    itemsize = jnp.dtype(predicted_state.dtype).itemsize

    out = pl.pallas_call(
        functools.partial(_pose_loss_kernel, inv_b=1.0 / b),
        out_shape=jax.ShapeDtypeStruct((1, 1), jnp.float32),
        grid=grid,
        in_specs=[
            pl.BlockSpec((tile_rows, _LANES), lambda i: (i, 0)),
            pl.BlockSpec((tile_rows, _LANES), lambda i: (i, 0)),
        ],
        out_specs=pl.BlockSpec((1, 1), lambda i: (0, 0)),
        scratch_shapes=[pltpu.VMEM((1, _LANES), jnp.float32)],
        compiler_params=pltpu.CompilerParams(
            dimension_semantics=("arbitrary",)),
        cost_estimate=pl.CostEstimate(
            flops=4 * padded_total,
            transcendentals=0,
            bytes_accessed=2 * padded_total * itemsize + 4),
    )(pred2d, true2d)
    return out[0, 0]


def _pose_loss_reference(predicted_state, true_state):
    sq = (predicted_state.astype(jnp.float32)
          - true_state.astype(jnp.float32)) ** 2
    return (100.0 * jnp.mean(sq[:, 0]) + jnp.mean(sq[:, 1])
            + 100.0 * jnp.mean(sq[:, 2]) + jnp.mean(sq[:, 3]))


if __name__ == "__main__":
    key = jax.random.PRNGKey(0)
    k1, k2, k3, k4 = jax.random.split(key, 4)

    # Small case matching the module's usage: a batch of (x, y, theta, v) states.
    B = 8
    predicted_state = jax.random.normal(k1, (B, 4), dtype=jnp.float32)
    true_state = jax.random.normal(k2, (B, 4), dtype=jnp.float32)

    loss = pose_loss(predicted_state, true_state)
    jax.block_until_ready(loss)
    ref = _pose_loss_reference(predicted_state, true_state)
    assert jnp.allclose(loss, ref, rtol=1e-5, atol=1e-5), (loss, ref)

    # Larger case exercising the multi-tile grid + accumulator + tail-padding path.
    B2 = 100000  # 400000 elems -> 3125 raw rows -> 2 grid steps of (2048, 128)
    pred2 = jax.random.normal(k3, (B2, 4), dtype=jnp.float32)
    true2 = jax.random.normal(k4, (B2, 4), dtype=jnp.float32)
    loss2 = pose_loss(pred2, true2)
    jax.block_until_ready(loss2)
    ref2 = _pose_loss_reference(pred2, true2)
    assert jnp.allclose(loss2, ref2, rtol=5e-4, atol=5e-4), (loss2, ref2)

    print("KERNEL_OK")
</pallas_src>

<mosaic_0001>
module attributes {stable_mosaic.version = 11 : i64} {
  func.func @_pose_loss_kernel(%arg0: i32, %arg1: memref<8x128xf32, #tpu.memory_space<vmem>>, %arg2: memref<8x128xf32, #tpu.memory_space<vmem>>, %arg3: memref<1x1xf32, #tpu.memory_space<vmem>>, %arg4: memref<1x128xf32, #tpu.memory_space<vmem>>) attributes {dimension_semantics = [#tpu.dimension_semantics<arbitrary>], iteration_bounds = array<i64: 1>, scalar_prefetch = 0 : i64, scratch_operands = 1 : i64, tpu.core_type = #tpu.core_type<tc>, window_params = [{transform_indices = @transform_0, window_bounds = array<i64: 8, 128>}, {transform_indices = @transform_1, window_bounds = array<i64: 8, 128>}, {pipeline_mode = #tpu.pipeline_mode<synchronous>, transform_indices = @transform_2, window_bounds = array<i64: 1, 1>}]} {
    %c0_i32 = arith.constant 0 : i32
    %0 = arith.cmpi eq, %arg0, %c0_i32 : i32
    %1 = arith.extui %0 : i1 to i32
    %c0_i32_0 = arith.constant 0 : i32
    %2 = arith.cmpi ne, %1, %c0_i32_0 : i32
    scf.if %2 {
      %cst_10 = arith.constant 0.000000e+00 : f32
      %15 = vector.broadcast %cst_10 : f32 to vector<1x128xf32>
      %c0_11 = arith.constant 0 : index
      %c0_12 = arith.constant 0 : index
      %16 = vector.load %arg4[%c0_11, %c0_12] : memref<1x128xf32, #tpu.memory_space<vmem>>, vector<1x128xf32>
      tpu.vector_store %arg4[%c0_11, %c0_12], %15 {strides = array<i32>} : memref<1x128xf32, #tpu.memory_space<vmem>>, vector<1x128xf32>,
    } else {
    }
    %c0 = arith.constant 0 : index
    %c0_1 = arith.constant 0 : index
    %3 = vector.load %arg1[%c0, %c0_1] : memref<8x128xf32, #tpu.memory_space<vmem>>, vector<8x128xf32>
    %c0_2 = arith.constant 0 : index
    %c0_3 = arith.constant 0 : index
    %4 = vector.load %arg2[%c0_2, %c0_3] : memref<8x128xf32, #tpu.memory_space<vmem>>, vector<8x128xf32>
    %5 = arith.subf %3, %4 : vector<8x128xf32>
    %c0_4 = arith.constant 0 : index
    %c0_5 = arith.constant 0 : index
    %6 = vector.load %arg4[%c0_4, %c0_5] : memref<1x128xf32, #tpu.memory_space<vmem>>, vector<1x128xf32>
    %7 = arith.mulf %5, %5 : vector<8x128xf32>
    %cst = arith.constant dense<0.000000e+00> : vector<128xf32>
    %8 = vector.multi_reduction <add>, %7, %cst [0] : vector<8x128xf32> to vector<128xf32>
    %9 = vector.shape_cast %8 : vector<128xf32> to vector<1x128xf32>
    %10 = arith.addf %6, %9 : vector<1x128xf32>
    %c0_6 = arith.constant 0 : index
    %c0_7 = arith.constant 0 : index
    %11 = vector.load %arg4[%c0_6, %c0_7] : memref<1x128xf32, #tpu.memory_space<vmem>>, vector<1x128xf32>
    tpu.vector_store %arg4[%c0_6, %c0_7], %10 {strides = array<i32>} : memref<1x128xf32, #tpu.memory_space<vmem>>, vector<1x128xf32>,
    %c0_i32_8 = arith.constant 0 : i32
    %12 = arith.cmpi eq, %arg0, %c0_i32_8 : i32
    %13 = arith.extui %12 : i1 to i32
    %c0_i32_9 = arith.constant 0 : i32
    %14 = arith.cmpi ne, %13, %c0_i32_9 : i32
    scf.if %14 {
      %15 = tpu.iota {dimensions = array<i32: 1>} : vector<1x128xi32>
      %c1_i32 = arith.constant 1 : i32
      %16 = vector.broadcast %c1_i32 : i32 to vector<1x128xi32>
      %17 = arith.andi %15, %16 : vector<1x128xi32>
      %c0_i32_10 = arith.constant 0 : i32
      %18 = vector.broadcast %c0_i32_10 : i32 to vector<1x128xi32>
      %19 = arith.cmpi eq, %17, %18 : vector<1x128xi32>
      %cst_11 = arith.constant 1.000000e+02 : f32
      %cst_12 = arith.constant 1.000000e+00 : f32
      %20 = vector.broadcast %cst_11 : f32 to vector<1x128xf32>
      %21 = vector.broadcast %cst_12 : f32 to vector<1x128xf32>
      %22 = arith.select %19, %20, %21 : vector<1x128xi1>, vector<1x128xf32>
      %c0_13 = arith.constant 0 : index
      %c0_14 = arith.constant 0 : index
      %23 = vector.load %arg4[%c0_13, %c0_14] : memref<1x128xf32, #tpu.memory_space<vmem>>, vector<1x128xf32>
      %24 = arith.mulf %23, %22 : vector<1x128xf32>
      %25 = vector.shape_cast %24 : vector<1x128xf32> to vector<1x1x128xf32>
      %cst_15 = arith.constant dense<0.000000e+00> : vector<1xf32>
      %26 = vector.multi_reduction <add>, %25, %cst_15 [1, 2] : vector<1x1x128xf32> to vector<1xf32>
      %27 = vector.shape_cast %26 : vector<1xf32> to vector<1x1x1xf32>
      %28 = vector.extract %27[0, 0, 0] : f32 from vector<1x1x1xf32>
      %29 = vector.broadcast %28 : f32 to vector<1x1xf32>
      %cst_16 = arith.constant 1.250000e-01 : f32
      %30 = vector.broadcast %cst_16 : f32 to vector<1x1xf32>
      %31 = arith.mulf %29, %30 : vector<1x1xf32>
      %c0_17 = arith.constant 0 : index
      %c0_18 = arith.constant 0 : index
      %32 = vector.load %arg3[%c0_17, %c0_18] : memref<1x1xf32, #tpu.memory_space<vmem>>, vector<1x1xf32>
      tpu.vector_store %arg3[%c0_17, %c0_18], %31 {strides = array<i32>} : memref<1x1xf32, #tpu.memory_space<vmem>>, vector<1x1xf32>,
    } else {
    }
    return
  }
  func.func @transform_0(%arg0: i32) -> (i32, i32) {
    %c0_i32 = arith.constant 0 : i32
    %c0_i32_0 = arith.constant 0 : i32
    return %arg0, %c0_i32 : i32, i32
  }
  func.func @transform_1(%arg0: i32) -> (i32, i32) {
    %c0_i32 = arith.constant 0 : i32
    %c0_i32_0 = arith.constant 0 : i32
    return %arg0, %c0_i32 : i32, i32
  }
  func.func @transform_2(%arg0: i32) -> (i32, i32) {
    %c0_i32 = arith.constant 0 : i32
    %c0_i32_0 = arith.constant 0 : i32
    %c0_i32_1 = arith.constant 0 : i32
    return %c0_i32, %c0_i32_0 : i32, i32
  }
}

</mosaic_0001>

<llo_original>
// kernel: tpu_custom_call.1
$region0: #{tpu_custom_call.1}
  #allocation0 [shape = 'u32[]', space=smem, size = 0x4, offset = 0x4, fixed_abs, tag = 'smem constant byte address 0x4 - core index']
  #allocation1 [shape = 'u32[144,128]{1,0:T(1,128)}', space=vmem, size = 0x12000, scoped, tag = 'internal scratch']
  #allocation2 [shape = 'f32[1,128]{1,0:T(1,128)}', space=vmem, size = 0x200, scoped, tag = 'scratch operand']
  %s0 = inlined_call_operand.hbm [shape: f32[8,128], index: 0, kind: input, shape index: {}]
  %s1 = inlined_call_operand.hbm [shape: f32[8,128], index: 1, kind: input, shape index: {}]
  %s2 = inlined_call_operand.hbm [shape: f32[1,1], index: 2, kind: output, shape index: {}]
  %s3 = sld [smem:[#allocation0]]
  $region34: #{tpu_custom_call.1} parent=0
    _
  %s5 = ssub.s32 1, %s3
  %s6 = scalar_select 0, %s5, %s3
  $region1: #{tpu_custom_call.1} parent=0
    #allocation3 [shape = 'u8[4096]{0}', space=vmem, size = 0x1000, scoped, tag = 'input window, operand 0, single buffered']
    #allocation4 [shape = 's32[1]{0}', space=sflag, size = 0x4, scoped, tag = 'scoped memory for tpu_custom_call.1']
    #allocation5 [shape = 's32[1]{0}', space=sflag, size = 0x4, scoped, tag = 'scoped memory for tpu_custom_call.1']
    #allocation6 [shape = 'u8[4096]{0}', space=vmem, size = 0x1000, scoped, tag = 'input window, operand 1, single buffered']
    #allocation7 [shape = 's32[1]{0}', space=sflag, size = 0x4, scoped, tag = 'scoped memory for tpu_custom_call.1']
    #allocation8 [shape = 'u8[512]{0}', space=vmem, size = 0x400, scoped, tag = 'output window, operand 0, single buffered']
    %7 = vsyncpa [#allocation4], 0
    %8 = vsyncpa [#allocation7], 0
    %9 = vsyncpa [#allocation5], 0
    // Predicated region
    $region2: #{tpu_custom_call.1} parent=1 // pred_check
      _
    $region3: #{tpu_custom_call.1} parent=1 // pred_check_branch
      %11 = sbr.rel (0) target = $region5
    $region4: #{tpu_custom_call.1} parent=1 // pred_region
      %s13 = ssub.s32 128, 128
      %14 = vsyncadd [#allocation4], %s13
      %s16 = sshll.u32 [#allocation3], 4
      %s17 = int_to_ptr.vmem [resolvable:$true] %s16
      %19 = dma.hbm_to_vmem [thread:$0]  %s0, 128, %s17, [#allocation4]
    $region5: #{tpu_custom_call.1} parent=1 // pred_fallthru
      _
    // Predicated region
    $region6: #{tpu_custom_call.1} parent=1 // pred_check
      _
    $region7: #{tpu_custom_call.1} parent=1 // pred_check_branch
      %21 = sbr.rel (0) target = $region9
    $region8: #{tpu_custom_call.1} parent=1 // pred_region
      %s23 = ssub.s32 128, 128
      %24 = vsyncadd [#allocation7], %s23
      %s26 = sshll.u32 [#allocation6], 4
      %s27 = int_to_ptr.vmem [resolvable:$true] %s26
      %29 = dma.hbm_to_vmem [thread:$0]  %s1, 128, %s27, [#allocation7]
    $region9: #{tpu_custom_call.1} parent=1 // pred_fallthru
      _
    // Predicated region
    $region10: #{tpu_custom_call.1} parent=1 // pred_check
      _
    $region11: #{tpu_custom_call.1} parent=1 // pred_check_branch
      %31 = sbr.rel (0) target = $region13
    $region12: #{tpu_custom_call.1} parent=1 // pred_region
      %32 = dma.done [#allocation4], 128
    $region13: #{tpu_custom_call.1} parent=1 // pred_fallthru
      _
    // Predicated region
    $region14: #{tpu_custom_call.1} parent=1 // pred_check
      _
    $region15: #{tpu_custom_call.1} parent=1 // pred_check_branch
      %34 = sbr.rel (0) target = $region17
    $region16: #{tpu_custom_call.1} parent=1 // pred_region
      %35 = dma.done [#allocation7], 128
    $region17: #{tpu_custom_call.1} parent=1 // pred_fallthru
      _
    %p36 = scmp.eq.s32.totalorder 0, 0
    // Predicated region
    $region18: #{tpu_custom_call.1} parent=1 // pred_check
      %p37 = pneg %p36
    $region19: #{tpu_custom_call.1} parent=1 // pred_check_branch
      %39 = sbr.rel (%p37) target = $region21
    $region20: #{tpu_custom_call.1} parent=1 // pred_region
      %40 = vst [vmem:[#allocation2] sm:$0x1] 0.0
    $region21: #{tpu_custom_call.1} parent=1 // pred_fallthru
      _
    %v41 = vld [vmem:[#allocation3] sm:$0xff]
    %v42 = vld [vmem:[#allocation6] sm:$0xff]
    %v43 = vsub.f32 %v41, %v42
    %v44 = vld [vmem:[#allocation2] sm:$0x1]
    %v45 = vmul.f32 %v43, %v43
    %v46 = vrot.slane %v45, 4
    %v47 = vadd.f32 %v45, %v46
    %v48 = vrot.slane %v47, 2
    %v49 = vadd.f32 %v47, %v48
    %v50 = vrot.slane %v49, 1
    %v51 = vadd.f32 %v49, %v50
    %v52 = vadd.f32 %v44, %v51
    %53 = vst [vmem:[#allocation2] sm:$0x1] %v52
    // Predicated region
    $region22: #{tpu_custom_call.1} parent=1 // pred_check
      %p54 = pneg %p36
    $region23: #{tpu_custom_call.1} parent=1 // pred_check_branch
      %56 = sbr.rel (%p54) target = $region25
    $region24: #{tpu_custom_call.1} parent=1 // pred_region
      %v57 = vlaneseq
      %v58 = vand.u32 %v57, 127
      %v59 = vand.u32 %v58, 1
      %vm60 = vcmp.eq.s32.totalorder %v59, 0
      %v61 = vsel %vm60, 100.0, 1.0
      %v62 = vld [vmem:[#allocation2] sm:$0x1]
      %v63 = vmul.f32 %v62, %v61
      %vm64 = vcmask 1040384
      %v65 = vsel %vm64, %v63, 0.0
      %66 = vadd.xlane.f32.xlu0 %v65
      %v67 = vpop.xlane.xlu0 %66
      %v68 = vrot.slane %v67, 4
      %v69 = vadd.f32 %v67, %v68
      %v70 = vrot.slane %v69, 2
      %v71 = vadd.f32 %v69, %v70
      %v72 = vrot.slane %v71, 1
      %v73 = vadd.f32 %v71, %v72
      %s74 = vtos %v73
      %v75 = vstv %s74
      %v76 = vmul.f32 %v75, 0.125
      %vm77 = vcmask 0
      %78 = vst.msk [vmem:[#allocation8] sm:$0x1] %vm77, %v76
    $region25: #{tpu_custom_call.1} parent=1 // pred_fallthru
      _
    // Predicated region
    $region26: #{tpu_custom_call.1} parent=1 // pred_check
      _
    $region27: #{tpu_custom_call.1} parent=1 // pred_check_branch
      %80 = sbr.rel (0) target = $region29
    $region28: #{tpu_custom_call.1} parent=1 // pred_region
      %s82 = ssub.s32 16, 16
      %83 = vsyncadd [#allocation5], %s82
      %s85 = sshll.u32 [#allocation8], 4
      %s86 = int_to_ptr.vmem [resolvable:$true] %s85
      %88 = dma.vmem_to_hbm [thread:$0]  %s86, 16, %s2, [#allocation5]
    $region29: #{tpu_custom_call.1} parent=1 // pred_fallthru
      _
    // Predicated region
    $region30: #{tpu_custom_call.1} parent=1 // pred_check
      _
    $region31: #{tpu_custom_call.1} parent=1 // pred_check_branch
      %90 = sbr.rel (0) target = $region33
    $region32: #{tpu_custom_call.1} parent=1 // pred_region
      %91 = dma.done [#allocation5], 16
    $region33: #{tpu_custom_call.1} parent=1 // pred_fallthru
      _
    %92 = vsyncpa [#allocation4], 1
    %93 = vsyncpa [#allocation7], 1
    %94 = vsyncpa [#allocation5], 1

</llo_original>
